<compile_context>
chip_gen: v6e
topology: v6e:2x2x1
jax: 0.10.0
libtpu: 0.0.40
codegen_flags: <defaults>
</compile_context>

<pallas_src>
import jax
import jax.numpy as jnp
from jax.experimental import pallas as pl
from jax.experimental.pallas import tpu as pltpu


def _round_up(x, m):
    return ((x + m - 1) // m) * m


# ---------------------------------------------------------------------------
# Kernel
# ---------------------------------------------------------------------------
def _mlp_kernel(x_ref, w1_ref, b1_ref, w2_ref, b2_ref, o_ref, acc_ref):
    hj = pl.program_id(1)

    @pl.when(hj == 0)
    def _():
        acc_ref[...] = jnp.zeros_like(acc_ref)

    # Layer 1 on this hidden chunk: bf16 x bf16 -> f32 on the MXU.
    h = jnp.dot(x_ref[...], w1_ref[...], preferred_element_type=jnp.float32)
    h = jnp.maximum(h + b1_ref[...], 0.0)          # bias + ReLU in f32

    # Layer 2 partial for this hidden chunk, accumulated in f32.
    acc_ref[...] += jnp.dot(h.astype(w2_ref.dtype), w2_ref[...],
                            preferred_element_type=jnp.float32)

    @pl.when(hj == pl.num_programs(1) - 1)
    def _():
        o_ref[...] = (acc_ref[...] + b2_ref[...]).astype(o_ref.dtype)


# ---------------------------------------------------------------------------
# Helpers
# ---------------------------------------------------------------------------
def _supports_buffered():
    if not hasattr(pl, "Buffered"):
        return False
    try:
        pl.BlockSpec((8, 128), lambda i, j: (0, 0), pipeline_mode=pl.Buffered(1))
        return True
    except TypeError:
        return False


_HAS_BUFFERED = _supports_buffered()


def _block_spec(shape, index_map, single_buffer):
    """Single-buffer blocks whose index map never changes (never re-fetched)."""
    if single_buffer and _HAS_BUFFERED:
        return pl.BlockSpec(shape, index_map, pipeline_mode=pl.Buffered(1))
    return pl.BlockSpec(shape, index_map)


def _vmem_limit_bytes(block_b, D_pad, block_h, C_pad, single_weights):
    bf16, f32 = 2, 4
    wbuf = 1 if single_weights else 2
    est = (
        2 * block_b * D_pad * bf16            # x tile (double-buffered)
        + wbuf * D_pad * block_h * bf16       # w1 chunk
        + wbuf * block_h * C_pad * bf16       # w2 chunk
        + wbuf * 8 * block_h * f32            # b1 chunk (sublane-padded)
        + 8 * C_pad * f32                     # b2 (single-buffered, constant)
        + 2 * block_b * C_pad * f32           # out tile (double-buffered)
        + block_b * C_pad * f32               # f32 accumulator scratch
        + block_b * block_h * (f32 + bf16)    # intermediate h + its bf16 cast
        + (4 << 20)                           # compiler temporaries slack
    )
    try:
        cap_total = int(pltpu.get_tpu_info().vmem_capacity_bytes)
    except Exception:
        cap_total = 64 << 20                  # conservative (v7x per-TC) fallback
    # Leave headroom under the per-core ceiling: 64 MiB -> 48 MiB (v7x),
    # 128 MiB -> 112 MiB (v5e/v6e).
    cap = max(cap_total - (16 << 20), cap_total // 2)
    return int(min(max(est, 32 << 20), cap))


def _choose_block_b(B, *, target_steps=4, max_block=512, min_block=128, mult=16):
    # Aim for ~target_steps grid steps over the batch without shrinking the MXU
    # M dim below ~128 rows (per-step overhead dominates for tiny tiles), and
    # without padding the batch by a large factor at awkward sizes.
    bb = _round_up(max(pl.cdiv(B, target_steps), 1), mult)
    bb = min(bb, max_block)
    bb = max(bb, min(min_block, _round_up(B, mult)))
    return bb


def _choose_block_h(H_pad, *, max_block=512):
    if H_pad <= max_block:
        return H_pad
    for cand in (max_block, 256, 128):
        if H_pad % cand == 0:
            return cand
    return 128


# ---------------------------------------------------------------------------
# pallas_call wrapper
# ---------------------------------------------------------------------------
def _mlp_pallas(x_p, w1_p, b1_p, w2_p, b2_p, *, block_b, block_h, out_dtype):
    B_pad, D_pad = x_p.shape
    H_pad, C_pad = w2_p.shape
    n_b = B_pad // block_b
    n_h = H_pad // block_h
    single_weights = (n_h == 1)   # whole weight resident -> never re-fetched

    cost = pl.CostEstimate(
        flops=2 * B_pad * (D_pad * H_pad + H_pad * C_pad),
        transcendentals=0,
        bytes_accessed=(2 * (B_pad * D_pad + D_pad * H_pad + H_pad * C_pad)
                        + 4 * (H_pad + C_pad + B_pad * C_pad)),
    )

    return pl.pallas_call(
        _mlp_kernel,
        out_shape=jax.ShapeDtypeStruct((B_pad, C_pad), out_dtype),
        grid_spec=pltpu.PrefetchScalarGridSpec(
            num_scalar_prefetch=0,
            grid=(n_b, n_h),
            in_specs=[
                pl.BlockSpec((block_b, D_pad), lambda i, j: (i, 0)),            # x
                _block_spec((D_pad, block_h), lambda i, j: (0, j), single_weights),  # w1
                _block_spec((1, block_h), lambda i, j: (0, j), single_weights),      # b1
                _block_spec((block_h, C_pad), lambda i, j: (j, 0), single_weights),  # w2
                _block_spec((1, C_pad), lambda i, j: (0, 0), True),                  # b2
            ],
            out_specs=pl.BlockSpec((block_b, C_pad), lambda i, j: (i, 0)),
            scratch_shapes=[pltpu.VMEM((block_b, C_pad), jnp.float32)],
        ),
        compiler_params=pltpu.CompilerParams(
            dimension_semantics=("parallel", "arbitrary"),
            vmem_limit_bytes=_vmem_limit_bytes(block_b, D_pad, block_h, C_pad,
                                               single_weights),
        ),
        cost_estimate=cost,
    )(x_p, w1_p, b1_p, w2_p, b2_p)


# ---------------------------------------------------------------------------
# Public API
# ---------------------------------------------------------------------------
def prepare_mlp_params(w1, b1, w2, b2, *, weight_dtype=jnp.bfloat16):
    """One-time padding (lane-dense multiples of 128) + bf16 cast of weights.

    w1: [D_in, H], b1: [H], w2: [H, C], b2: [C]  (weights already transposed
    vs. PyTorch's [out, in]).  Biases stay f32 for the f32 epilogue.
    """
    D_in, H = w1.shape
    C = w2.shape[1]
    D_pad, H_pad, C_pad = (_round_up(d, 128) for d in (D_in, H, C))

    def pad2(a, rows, cols):
        pr, pc = rows - a.shape[0], cols - a.shape[1]
        return a if (pr == 0 and pc == 0) else jnp.pad(a, ((0, pr), (0, pc)))

    return {
        "w1": pad2(w1, D_pad, H_pad).astype(weight_dtype),
        "b1": pad2(b1.reshape(1, H).astype(jnp.float32), 1, H_pad),
        "w2": pad2(w2, H_pad, C_pad).astype(weight_dtype),
        "b2": pad2(b2.reshape(1, C).astype(jnp.float32), 1, C_pad),
        "dims": (D_in, H, C),
    }


def mlp_forward(x, params, *, block_b=None, block_h=None,
                activation_dtype=jnp.bfloat16):
    """Fused MLP forward: relu(x @ w1 + b1) @ w2 + b2  -> f32 [B, C]."""
    D_in, H, C = params["dims"]
    w1_p, b1_p, w2_p, b2_p = params["w1"], params["b1"], params["w2"], params["b2"]
    D_pad, H_pad = w1_p.shape
    C_pad = w2_p.shape[1]
    B = x.shape[0]
    assert x.shape[1] == D_in

    if block_b is None:
        block_b = _choose_block_b(B)
    block_b = max(16, _round_up(min(block_b, _round_up(B, 16)), 16))

    if block_h is None:
        block_h = _choose_block_h(H_pad)
    block_h = min(_round_up(block_h, 128), H_pad)
    assert H_pad % block_h == 0, "block_h must divide the padded hidden dim"

    B_pad = _round_up(B, block_b)

    x_p = x
    if (B_pad, D_pad) != x.shape:
        x_p = jnp.pad(x, ((0, B_pad - B), (0, D_pad - D_in)))
    x_p = x_p.astype(activation_dtype)

    out_p = _mlp_pallas(x_p, w1_p, b1_p, w2_p, b2_p,
                        block_b=block_b, block_h=block_h,
                        out_dtype=jnp.float32)

    if out_p.shape != (B, C):
        out_p = out_p[:B, :C]
    return out_p


def init_mlp_params(key, input_size, hidden_size, num_classes, dtype=jnp.float32):
    """Matches the PyTorch module __init__: kaiming_normal_ (fan_in, gain
    sqrt(2)) on weights, zeros on biases.  Weights returned transposed
    ([in, out]) relative to PyTorch's [out, in]."""
    k1, k2 = jax.random.split(key)
    std1 = (2.0 / input_size) ** 0.5
    std2 = (2.0 / hidden_size) ** 0.5
    w1 = (jax.random.normal(k1, (hidden_size, input_size), dtype) * std1).T
    w2 = (jax.random.normal(k2, (num_classes, hidden_size), dtype) * std2).T
    b1 = jnp.zeros((hidden_size,), dtype)
    b2 = jnp.zeros((num_classes,), dtype)
    return w1, b1, w2, b2


if __name__ == "__main__":
    # Small, deliberately non-128-aligned shapes; block_b=64 / block_h=128 give
    # a (4, 2) grid so batch pipelining AND the hidden-axis accumulator path
    # are both exercised.
    batch, input_size, hidden_size, num_classes = 200, 100, 160, 10

    key = jax.random.PRNGKey(0)
    kx, kp = jax.random.split(key)
    x = jax.random.normal(kx, (batch, input_size), jnp.float32)
    w1, b1, w2, b2 = init_mlp_params(kp, input_size, hidden_size, num_classes)

    params = prepare_mlp_params(w1, b1, w2, b2)          # one-time pad + bf16 cast
    out = mlp_forward(x, params, block_b=64, block_h=128)
    out = jax.block_until_ready(out)
    assert out.shape == (batch, num_classes)

    # Reference with the same bf16-in / f32-accumulate numerics as the kernel.
    xb = x.astype(jnp.bfloat16)
    w1b = w1.astype(jnp.bfloat16)
    w2b = w2.astype(jnp.bfloat16)
    h_ref = jnp.maximum(jnp.dot(xb, w1b, preferred_element_type=jnp.float32) + b1, 0.0)
    ref = jnp.dot(h_ref.astype(jnp.bfloat16), w2b,
                  preferred_element_type=jnp.float32) + b2
    assert jnp.allclose(out, ref, atol=1e-3, rtol=1e-3), "mismatch vs bf16 reference"

    # Loose sanity check against the full-f32 reference (bf16 quantization only).
    ref_f32 = jnp.maximum(x @ w1 + b1, 0.0) @ w2 + b2
    assert jnp.allclose(out, ref_f32, atol=1e-1, rtol=1e-1), "mismatch vs f32 reference"

    print("KERNEL_OK")
</pallas_src>

<mosaic_0001>
module attributes {stable_mosaic.version = 11 : i64} {
  func.func @_mlp_kernel(%arg0: i32, %arg1: i32, %arg2: memref<64x128xbf16, #tpu.memory_space<vmem>>, %arg3: memref<128x128xbf16, #tpu.memory_space<vmem>>, %arg4: memref<1x128xf32, #tpu.memory_space<vmem>>, %arg5: memref<128x128xbf16, #tpu.memory_space<vmem>>, %arg6: memref<1x128xf32, #tpu.memory_space<vmem>>, %arg7: memref<64x128xf32, #tpu.memory_space<vmem>>, %arg8: memref<64x128xf32, #tpu.memory_space<vmem>>) attributes {dimension_semantics = [#tpu.dimension_semantics<parallel>, #tpu.dimension_semantics<arbitrary>], iteration_bounds = array<i64: 4, 2>, scalar_prefetch = 0 : i64, scratch_operands = 1 : i64, tpu.core_type = #tpu.core_type<tc>, window_params = [{transform_indices = @transform_0, window_bounds = array<i64: 64, 128>}, {transform_indices = @transform_1, window_bounds = array<i64: 128, 128>}, {transform_indices = @transform_2, window_bounds = array<i64: 1, 128>}, {transform_indices = @transform_3, window_bounds = array<i64: 128, 128>}, {pipeline_mode = #tpu.pipeline_mode<synchronous>, transform_indices = @transform_4, window_bounds = array<i64: 1, 128>}, {transform_indices = @transform_5, window_bounds = array<i64: 64, 128>}]} {
    %c0_i32 = arith.constant 0 : i32
    %0 = arith.cmpi eq, %arg1, %c0_i32 : i32
    %1 = arith.extui %0 : i1 to i32
    %c0_i32_0 = arith.constant 0 : i32
    %2 = arith.cmpi ne, %1, %c0_i32_0 : i32
    scf.if %2 {
      %cst_15 = arith.constant 0.000000e+00 : f32
      %20 = vector.broadcast %cst_15 : f32 to vector<64x128xf32>
      %c0_16 = arith.constant 0 : index
      %c0_17 = arith.constant 0 : index
      %21 = vector.load %arg8[%c0_16, %c0_17] : memref<64x128xf32, #tpu.memory_space<vmem>>, vector<64x128xf32>
      tpu.vector_store %arg8[%c0_16, %c0_17], %20 {strides = array<i32>} : memref<64x128xf32, #tpu.memory_space<vmem>>, vector<64x128xf32>,
    } else {
    }
    %c0 = arith.constant 0 : index
    %c0_1 = arith.constant 0 : index
    %3 = vector.load %arg2[%c0, %c0_1] : memref<64x128xbf16, #tpu.memory_space<vmem>>, vector<64x128xbf16>
    %c0_2 = arith.constant 0 : index
    %c0_3 = arith.constant 0 : index
    %4 = vector.load %arg3[%c0_2, %c0_3] : memref<128x128xbf16, #tpu.memory_space<vmem>>, vector<128x128xbf16>
    %cst = arith.constant dense<0.000000e+00> : vector<64x128xf32>
    %5 = tpu.matmul %3, %4, %cst {dimension_numbers = #tpu.dot_dimension_numbers<[1], [0], [0], [1], [0, 0, 1, 1], [], []>} : vector<64x128xbf16>, vector<128x128xbf16>, vector<64x128xf32> -> vector<64x128xf32>
    %c0_4 = arith.constant 0 : index
    %c0_5 = arith.constant 0 : index
    %6 = vector.load %arg4[%c0_4, %c0_5] : memref<1x128xf32, #tpu.memory_space<vmem>>, vector<1x128xf32>
    %7 = vector.broadcast %6 : vector<1x128xf32> to vector<64x128xf32>
    %8 = arith.addf %5, %7 : vector<64x128xf32>
    %cst_6 = arith.constant 0.000000e+00 : f32
    %9 = vector.broadcast %cst_6 : f32 to vector<64x128xf32>
    %10 = arith.maximumf %8, %9 : vector<64x128xf32>
    %c0_7 = arith.constant 0 : index
    %c0_8 = arith.constant 0 : index
    %11 = vector.load %arg8[%c0_7, %c0_8] : memref<64x128xf32, #tpu.memory_space<vmem>>, vector<64x128xf32>
    %12 = arith.truncf %10 : vector<64x128xf32> to vector<64x128xbf16>
    %c0_9 = arith.constant 0 : index
    %c0_10 = arith.constant 0 : index
    %13 = vector.load %arg5[%c0_9, %c0_10] : memref<128x128xbf16, #tpu.memory_space<vmem>>, vector<128x128xbf16>
    %cst_11 = arith.constant dense<0.000000e+00> : vector<64x128xf32>
    %14 = tpu.matmul %12, %13, %cst_11 {dimension_numbers = #tpu.dot_dimension_numbers<[1], [0], [0], [1], [0, 0, 1, 1], [], []>} : vector<64x128xbf16>, vector<128x128xbf16>, vector<64x128xf32> -> vector<64x128xf32>
    %15 = arith.addf %11, %14 : vector<64x128xf32>
    %c0_12 = arith.constant 0 : index
    %c0_13 = arith.constant 0 : index
    %16 = vector.load %arg8[%c0_12, %c0_13] : memref<64x128xf32, #tpu.memory_space<vmem>>, vector<64x128xf32>
    tpu.vector_store %arg8[%c0_12, %c0_13], %15 {strides = array<i32>} : memref<64x128xf32, #tpu.memory_space<vmem>>, vector<64x128xf32>,
    %c1_i32 = arith.constant 1 : i32
    %17 = arith.cmpi eq, %arg1, %c1_i32 : i32
    %18 = arith.extui %17 : i1 to i32
    %c0_i32_14 = arith.constant 0 : i32
    %19 = arith.cmpi ne, %18, %c0_i32_14 : i32
    scf.if %19 {
      %c0_15 = arith.constant 0 : index
      %c0_16 = arith.constant 0 : index
      %20 = vector.load %arg8[%c0_15, %c0_16] : memref<64x128xf32, #tpu.memory_space<vmem>>, vector<64x128xf32>
      %c0_17 = arith.constant 0 : index
      %c0_18 = arith.constant 0 : index
      %21 = vector.load %arg6[%c0_17, %c0_18] : memref<1x128xf32, #tpu.memory_space<vmem>>, vector<1x128xf32>
      %22 = vector.broadcast %21 : vector<1x128xf32> to vector<64x128xf32>
      %23 = arith.addf %20, %22 : vector<64x128xf32>
      %c0_19 = arith.constant 0 : index
      %c0_20 = arith.constant 0 : index
      %24 = vector.load %arg7[%c0_19, %c0_20] : memref<64x128xf32, #tpu.memory_space<vmem>>, vector<64x128xf32>
      tpu.vector_store %arg7[%c0_19, %c0_20], %23 {strides = array<i32>} : memref<64x128xf32, #tpu.memory_space<vmem>>, vector<64x128xf32>,
    } else {
    }
    return
  }
  func.func @transform_0(%arg0: i32, %arg1: i32) -> (i32, i32) {
    %c0_i32 = arith.constant 0 : i32
    %c0_i32_0 = arith.constant 0 : i32
    return %arg0, %c0_i32 : i32, i32
  }
  func.func @transform_1(%arg0: i32, %arg1: i32) -> (i32, i32) {
    %c0_i32 = arith.constant 0 : i32
    %c0_i32_0 = arith.constant 0 : i32
    return %c0_i32, %arg1 : i32, i32
  }
  func.func @transform_2(%arg0: i32, %arg1: i32) -> (i32, i32) {
    %c0_i32 = arith.constant 0 : i32
    %c0_i32_0 = arith.constant 0 : i32
    return %c0_i32, %arg1 : i32, i32
  }
  func.func @transform_3(%arg0: i32, %arg1: i32) -> (i32, i32) {
    %c0_i32 = arith.constant 0 : i32
    %c0_i32_0 = arith.constant 0 : i32
    return %arg1, %c0_i32 : i32, i32
  }
  func.func @transform_4(%arg0: i32, %arg1: i32) -> (i32, i32) {
    %c0_i32 = arith.constant 0 : i32
    %c0_i32_0 = arith.constant 0 : i32
    %c0_i32_1 = arith.constant 0 : i32
    return %c0_i32, %c0_i32_0 : i32, i32
  }
  func.func @transform_5(%arg0: i32, %arg1: i32) -> (i32, i32) {
    %c0_i32 = arith.constant 0 : i32
    %c0_i32_0 = arith.constant 0 : i32
    return %arg0, %c0_i32 : i32, i32
  }
}

</mosaic_0001>

<llo_original>
// kernel: tpu_custom_call.1
$region0: #{tpu_custom_call.1}
  #allocation0 [shape = 'u32[]', space=smem, size = 0x4, offset = 0x4, fixed_abs, tag = 'smem constant byte address 0x4 - core index']
  #allocation1 [shape = 'u32[144,128]{1,0:T(1,128)}', space=vmem, size = 0x12000, scoped, tag = 'internal scratch']
  #allocation2 [shape = 'f32[64,128]{1,0:T(8,128)}', space=vmem, size = 0x8000, scoped, tag = 'scratch operand']
  %s0 = inlined_call_operand.hbm [shape: bf16[256,128], index: 0, kind: input, shape index: {}]
  %s1 = inlined_call_operand.hbm [shape: bf16[128,256], index: 1, kind: input, shape index: {}]
  %s2 = inlined_call_operand.vmem [shape: f32[1,256], index: 2, kind: input, shape index: {}]
  %s3 = inlined_call_operand.hbm [shape: bf16[256,128], index: 3, kind: input, shape index: {}]
  %s4 = inlined_call_operand.vmem [shape: f32[1,128], index: 4, kind: input, shape index: {}]
  %s5 = inlined_call_operand.hbm [shape: f32[256,128], index: 5, kind: output, shape index: {}]
  %s6 = sld [smem:[#allocation0]]
  $region73: #{tpu_custom_call.1} parent=0
    _
  %s8 = ssub.s32 1, %s6
  %s9 = scalar_select 0, %s8, %s6
  $region1: #{tpu_custom_call.1} parent=0
    #allocation3 [shape = 'u8[32768]{0}', space=vmem, size = 0x8000, scoped, tag = 'input window, operand 0']
    #allocation4 [shape = 's32[2]{0}', space=sflag, size = 0x8, scoped, tag = 'scoped memory for tpu_custom_call.1']
    #allocation5 [shape = 's32[2]{0}', space=sflag, size = 0x8, scoped, tag = 'scoped memory for tpu_custom_call.1']
    #allocation6 [shape = 'u8[65536]{0}', space=vmem, size = 0x10000, scoped, tag = 'input window, operand 1']
    #allocation7 [shape = 's32[2]{0}', space=sflag, size = 0x8, scoped, tag = 'scoped memory for tpu_custom_call.1']
    #allocation8 [shape = 'u8[65536]{0}', space=vmem, size = 0x10000, scoped, tag = 'input window, operand 3']
    #allocation9 [shape = 'u8[65536]{0}', space=vmem, size = 0x10000, scoped, tag = 'output window, operand 0']
    %10 = vsyncpa [#allocation4], 0
    %s11 = scalar_lea.sflag [#allocation4], 1
    %12 = vsyncpa %s11, 0
    %13 = vsyncpa [#allocation7], 0
    %s14 = scalar_lea.sflag [#allocation7], 1
    %15 = vsyncpa %s14, 0
    %16 = vsyncpa [#allocation5], 0
    %s17 = scalar_lea.sflag [#allocation5], 1
    %18 = vsyncpa %s17, 0
    loop: start=0, step=1, limit=10
    $region2: #{tpu_custom_call.1} parent=1 // loop_pre_header
      _
    $region3: #{tpu_custom_call.1} parent=1 // loop_header
      %s20 = sphi 0, %s24
      %p21 = scmp.ge.s32.totalorder %s20, 10
      %s27 = sphi 0, %s39
      %s28 = sphi 0, %s35
      %s29 = sphi 0, %s27
      %s30 = sphi 0, %s28
      %s31 = sphi 0, %s29
      %s32 = sphi 0, %s30
      %s42 = sphi 0, %s44
      %s45 = sphi 0, %s42
      %s46 = sphi 0, %s45
      %s62 = sphi 0, %s46
      %s68 = sphi 0, %s70
      %s71 = sphi 0, %s68
      %s72 = sphi 0, %s71
      %s88 = sphi 0, %s72
      %s94 = sphi 0, %s96
      %s97 = sphi 0, %s94
      %s98 = sphi 0, %s97
      %s114 = sphi 0, %s98
      %s120 = sphi 0, %s122
      %s123 = sphi 0, %s120
      %s124 = sphi 0, %s123
      %s140 = sphi 0, %s124
      %s144 = sphi 0, %s144
      %s146 = sphi 0, %s144
      %s147 = sphi 0, %s146
      %s161 = sphi 0, %s147
      %s167 = sphi 0, %s169
      %s170 = sphi 0, %s167
      %s171 = sphi 0, %s170
      %s187 = sphi 0, %s171
    $region4: #{tpu_custom_call.1} parent=1 // loop_header_branch
      %23 = sbr.rel (%p21) target = $region8
    $region5: #{tpu_custom_call.1} parent=1 // loop_body
      %s25 = ssub.s32 %s20, 1
      %s26 = ssub.s32 %s20, 2
      %s33 = sadd.s32 1, %s28
      %p34 = scmp.ge.s32.totalorder %s33, 2
      %s35 = scalar_select %p34, 0, %s33
      %s36 = sadd.s32 1, %s27
      %s37 = scalar_select %p34, %s36, %s27
      %p38 = scmp.ge.s32.totalorder %s37, 4
      %s39 = scalar_select %p38, 0, %s37
      %s40 = ssub.s32 %s27, %s39
      %p41 = scmp.eq.s32.totalorder %s40, 0
      %s43 = sadd.s32 %s42, 1
      %s44 = scalar_select %p41, %s42, %s43
      %p47 = pneg %p41
      %p48 = scmp.eq.s32.totalorder %s20, 7
      %p49 = por %p47, %p48
      %p50 = scmp.ne.s32.totalorder %s42, %s45
      %p51 = scmp.eq.s32.totalorder %s20, 0
      %p52 = por %p50, %p51
      %p53 = scmp.ne.s32.totalorder %s42, %s45
      %p54 = scmp.eq.s32.totalorder %s25, 7
      %p55 = por %p53, %p54
      %p56 = scmp.ne.s32.totalorder %s45, %s46
      %p57 = scmp.eq.s32.totalorder %s25, 0
      %p58 = por %p56, %p57
      %p59 = scmp.ne.s32.totalorder %s45, %s46
      %p60 = scmp.eq.s32.totalorder %s26, 7
      %p61 = por %p59, %p60
      %p63 = scmp.ne.s32.totalorder %s46, %s62
      %p64 = scmp.eq.s32.totalorder %s26, 0
      %p65 = por %p63, %p64
      %s66 = ssub.s32 %s28, %s35
      %p67 = scmp.eq.s32.totalorder %s66, 0
      %s69 = sadd.s32 %s68, 1
      %s70 = scalar_select %p67, %s68, %s69
      %p73 = pneg %p67
      %p74 = scmp.eq.s32.totalorder %s20, 7
      %p75 = por %p73, %p74
      %p76 = scmp.ne.s32.totalorder %s68, %s71
      %p77 = scmp.eq.s32.totalorder %s20, 0
      %p78 = por %p76, %p77
      %p79 = scmp.ne.s32.totalorder %s68, %s71
      %p80 = scmp.eq.s32.totalorder %s25, 7
      %p81 = por %p79, %p80
      %p82 = scmp.ne.s32.totalorder %s71, %s72
      %p83 = scmp.eq.s32.totalorder %s25, 0
      %p84 = por %p82, %p83
      %p85 = scmp.ne.s32.totalorder %s71, %s72
      %p86 = scmp.eq.s32.totalorder %s26, 7
      %p87 = por %p85, %p86
      %p89 = scmp.ne.s32.totalorder %s72, %s88
      %p90 = scmp.eq.s32.totalorder %s26, 0
      %p91 = por %p89, %p90
      %s92 = ssub.s32 %s28, %s35
      %p93 = scmp.eq.s32.totalorder %s92, 0
      %s95 = sadd.s32 %s94, 1
      %s96 = scalar_select %p93, %s94, %s95
      %p99 = pneg %p93
      %p100 = scmp.eq.s32.totalorder %s20, 7
      %p101 = por %p99, %p100
      %p102 = scmp.ne.s32.totalorder %s94, %s97
      %p103 = scmp.eq.s32.totalorder %s20, 0
      %p104 = por %p102, %p103
      %p105 = scmp.ne.s32.totalorder %s94, %s97
      %p106 = scmp.eq.s32.totalorder %s25, 7
      %p107 = por %p105, %p106
      %p108 = scmp.ne.s32.totalorder %s97, %s98
      %p109 = scmp.eq.s32.totalorder %s25, 0
      %p110 = por %p108, %p109
      %p111 = scmp.ne.s32.totalorder %s97, %s98
      %p112 = scmp.eq.s32.totalorder %s26, 7
      %p113 = por %p111, %p112
      %p115 = scmp.ne.s32.totalorder %s98, %s114
      %p116 = scmp.eq.s32.totalorder %s26, 0
      %p117 = por %p115, %p116
      %s118 = ssub.s32 %s28, %s35
      %p119 = scmp.eq.s32.totalorder %s118, 0
      %s121 = sadd.s32 %s120, 1
      %s122 = scalar_select %p119, %s120, %s121
      %p125 = pneg %p119
      %p126 = scmp.eq.s32.totalorder %s20, 7
      %p127 = por %p125, %p126
      %p128 = scmp.ne.s32.totalorder %s120, %s123
      %p129 = scmp.eq.s32.totalorder %s20, 0
      %p130 = por %p128, %p129
      %p131 = scmp.ne.s32.totalorder %s120, %s123
      %p132 = scmp.eq.s32.totalorder %s25, 7
      %p133 = por %p131, %p132
      %p134 = scmp.ne.s32.totalorder %s123, %s124
      %p135 = scmp.eq.s32.totalorder %s25, 0
      %p136 = por %p134, %p135
      %p137 = scmp.ne.s32.totalorder %s123, %s124
      %p138 = scmp.eq.s32.totalorder %s26, 7
      %p139 = por %p137, %p138
      %p141 = scmp.ne.s32.totalorder %s124, %s140
      %p142 = scmp.eq.s32.totalorder %s26, 0
      %p143 = por %p141, %p142
      %s145 = sadd.s32 %s144, 1
      %p148 = scmp.eq.s32.totalorder %s20, 7
      %p149 = scmp.ne.s32.totalorder %s144, %s146
      %p150 = scmp.eq.s32.totalorder %s20, 0
      %p151 = por %p149, %p150
      %p152 = scmp.ne.s32.totalorder %s144, %s146
      %p153 = scmp.eq.s32.totalorder %s25, 7
      %p154 = por %p152, %p153
      %p155 = scmp.ne.s32.totalorder %s146, %s147
      %p156 = scmp.eq.s32.totalorder %s25, 0
      %p157 = por %p155, %p156
      %p158 = scmp.ne.s32.totalorder %s146, %s147
      %p159 = scmp.eq.s32.totalorder %s26, 7
      %p160 = por %p158, %p159
      %p162 = scmp.ne.s32.totalorder %s147, %s161
      %p163 = scmp.eq.s32.totalorder %s26, 0
      %p164 = por %p162, %p163
      %s165 = ssub.s32 %s27, %s39
      %p166 = scmp.eq.s32.totalorder %s165, 0
      %s168 = sadd.s32 %s167, 1
      %s169 = scalar_select %p166, %s167, %s168
      %p172 = pneg %p166
      %p173 = scmp.eq.s32.totalorder %s20, 7
      %p174 = por %p172, %p173
      %p175 = scmp.ne.s32.totalorder %s167, %s170
      %p176 = scmp.eq.s32.totalorder %s20, 0
      %p177 = por %p175, %p176
      %p178 = scmp.ne.s32.totalorder %s167, %s170
      %p179 = scmp.eq.s32.totalorder %s25, 7
      %p180 = por %p178, %p179
      %p181 = scmp.ne.s32.totalorder %s170, %s171
      %p182 = scmp.eq.s32.totalorder %s25, 0
      %p183 = por %p181, %p182
      %p184 = scmp.ne.s32.totalorder %s170, %s171
      %p185 = scmp.eq.s32.totalorder %s26, 7
      %p186 = por %p184, %p185
      %p188 = scmp.ne.s32.totalorder %s171, %s187
      %p189 = scmp.eq.s32.totalorder %s26, 0
      %p190 = por %p188, %p189
      %p191 = scmp.le.s32.totalorder 1, %s20
      %p192 = scmp.lt.s32.totalorder %s20, 9
      %p193 = pnand %p191, %p192
      %p194 = pneg %p193
      // Predicated region
      $region9: #{tpu_custom_call.1} parent=5 // pred_check
        _
      $region10: #{tpu_custom_call.1} parent=5 // pred_check_branch
        %196 = sbr.rel (%p193) target = $region12
      $region11: #{tpu_custom_call.1} parent=5 // pred_region
        %s197 = ssub.s32 %s20, 1
        // Predicated region
        $region13: #{tpu_custom_call.1} parent=11 // pred_check
          %p198 = pneg %p157
        $region14: #{tpu_custom_call.1} parent=11 // pred_check_branch
          %200 = sbr.rel (%p198) target = $region16
        $region15: #{tpu_custom_call.1} parent=11 // pred_region
          _
        $region16: #{tpu_custom_call.1} parent=11 // pred_fallthru
          _
      $region12: #{tpu_custom_call.1} parent=5 // pred_fallthru
        _
      %p201 = scmp.lt.s32.totalorder %s20, 8
      // Predicated region
      $region17: #{tpu_custom_call.1} parent=5 // pred_check
        %p202 = pneg %p201
      $region18: #{tpu_custom_call.1} parent=5 // pred_check_branch
        %204 = sbr.rel (%p202) target = $region20
      $region19: #{tpu_custom_call.1} parent=5 // pred_region
        // Predicated region
        $region21: #{tpu_custom_call.1} parent=19 // pred_check
          %p205 = pneg %p52
        $region22: #{tpu_custom_call.1} parent=19 // pred_check_branch
          %207 = sbr.rel (%p205) target = $region24
        $region23: #{tpu_custom_call.1} parent=19 // pred_region
          %s208 = sand.u32 %s42, 1
          %s209 = scalar_lea.sflag [#allocation4], %s208
          %s210 = sand.u32 %s42, 1
          %s211 = smul.addr %s210, 32
          %s212 = scalar_lea.vmem [#allocation3], %s211
          %s213 = smul.u32 8, %s27
          %s215 = ssub.s32 512, 512
          %216 = vsyncadd %s209, %s215
          %s217 = smul.addr %s213, 64
          %s218 = scalar_lea.hbm %s0, %s217
          %s219 = sshll.u32 %s212, 4
          %s220 = int_to_ptr.vmem [resolvable:$true] %s219
          %225 = dma.hbm_to_vmem [thread:$0]  %s218, 512, %s220, %s209, 64, 64, 4
        $region24: #{tpu_custom_call.1} parent=19 // pred_fallthru
          _
        // Predicated region
        $region25: #{tpu_custom_call.1} parent=19 // pred_check
          %p226 = pneg %p78
        $region26: #{tpu_custom_call.1} parent=19 // pred_check_branch
          %228 = sbr.rel (%p226) target = $region28
        $region27: #{tpu_custom_call.1} parent=19 // pred_region
          %s229 = sand.u32 %s20, 1
          %s230 = scalar_lea.sflag [#allocation7], %s229
          %s231 = sand.u32 %s68, 1
          %s232 = smul.addr %s231, 64
          %s233 = scalar_lea.vmem [#allocation6], %s232
          %s235 = ssub.s32 1024, 1024
          %236 = vsyncadd %s230, %s235
          %s237 = smul.addr %s28, 64
          %s238 = scalar_lea.hbm %s1, %s237
          %s239 = sshll.u32 %s233, 4
          %s240 = int_to_ptr.vmem [resolvable:$true] %s239
          %245 = dma.hbm_to_vmem [thread:$0]  %s238, 1024, %s240, %s230, 128, 64, 4
        $region28: #{tpu_custom_call.1} parent=19 // pred_fallthru
          _
        // Predicated region
        $region29: #{tpu_custom_call.1} parent=19 // pred_check
          %p246 = pneg %p104
        $region30: #{tpu_custom_call.1} parent=19 // pred_check_branch
          %248 = sbr.rel (%p246) target = $region32
        $region31: #{tpu_custom_call.1} parent=19 // pred_region
          %p249 = scmp.lt.s32.totalorder %s28, 1
          %s250 = scalar_select %p249, %s28, 1
          %s251 = scalar_lea.vmem %s2, %s250
        $region32: #{tpu_custom_call.1} parent=19 // pred_fallthru
          _
        // Predicated region
        $region33: #{tpu_custom_call.1} parent=19 // pred_check
          %p252 = pneg %p130
        $region34: #{tpu_custom_call.1} parent=19 // pred_check_branch
          %254 = sbr.rel (%p252) target = $region36
        $region35: #{tpu_custom_call.1} parent=19 // pred_region
          %s255 = sand.u32 %s20, 1
          %s256 = scalar_lea.sflag [#allocation7], %s255
          %s257 = sand.u32 %s120, 1
          %s258 = smul.addr %s257, 64
          %s259 = scalar_lea.vmem [#allocation8], %s258
          %s260 = smul.u32 16, %s28
          %s262 = ssub.s32 1024, 1024
          %263 = vsyncadd %s256, %s262
          %s264 = smul.addr %s260, 64
          %s265 = scalar_lea.hbm %s3, %s264
          %s266 = sshll.u32 %s259, 4
          %s267 = int_to_ptr.vmem [resolvable:$true] %s266
          %272 = dma.hbm_to_vmem [thread:$0]  %s265, 1024, %s267, %s256, 64, 64, 4
        $region36: #{tpu_custom_call.1} parent=19 // pred_fallthru
          _
      $region20: #{tpu_custom_call.1} parent=5 // pred_fallthru
        _
      %p273 = scmp.le.s32.totalorder 1, %s20
      %p274 = scmp.lt.s32.totalorder %s20, 9
      %p275 = pnand %p273, %p274
      %p276 = pneg %p275
      // Predicated region
      $region37: #{tpu_custom_call.1} parent=5 // pred_check
        _
      $region38: #{tpu_custom_call.1} parent=5 // pred_check_branch
        %278 = sbr.rel (%p275) target = $region40
      $region39: #{tpu_custom_call.1} parent=5 // pred_region
        %s279 = ssub.s32 %s20, 1
        %s280 = sand.u32 %s45, 1
        %s281 = scalar_lea.sflag [#allocation4], %s280
        %s282 = sand.u32 %s45, 1
        %s283 = smul.addr %s282, 32
        %s284 = scalar_lea.vmem [#allocation3], %s283
        // Predicated region
        $region41: #{tpu_custom_call.1} parent=39 // pred_check
          %p285 = pneg %p58
        $region42: #{tpu_custom_call.1} parent=39 // pred_check_branch
          %287 = sbr.rel (%p285) target = $region44
        $region43: #{tpu_custom_call.1} parent=39 // pred_region
          %288 = dma.done %s281, 512
        $region44: #{tpu_custom_call.1} parent=39 // pred_fallthru
          _
        %s289 = sand.u32 %s25, 1
        %s290 = scalar_lea.sflag [#allocation7], %s289
        %s291 = sand.u32 %s71, 1
        %s292 = smul.addr %s291, 64
        %s293 = scalar_lea.vmem [#allocation6], %s292
        // Predicated region
        $region45: #{tpu_custom_call.1} parent=39 // pred_check
          %p294 = pneg %p84
        $region46: #{tpu_custom_call.1} parent=39 // pred_check_branch
          %296 = sbr.rel (%p294) target = $region48
        $region47: #{tpu_custom_call.1} parent=39 // pred_region
          %297 = dma.done %s290, 1024
        $region48: #{tpu_custom_call.1} parent=39 // pred_fallthru
          _
        %s298 = sand.u32 %s25, 1
        %s299 = scalar_lea.sflag [#allocation7], %s298
        %s300 = sand.u32 %s123, 1
        %s301 = smul.addr %s300, 64
        %s302 = scalar_lea.vmem [#allocation8], %s301
        // Predicated region
        $region49: #{tpu_custom_call.1} parent=39 // pred_check
          %p303 = pneg %p136
        $region50: #{tpu_custom_call.1} parent=39 // pred_check_branch
          %305 = sbr.rel (%p303) target = $region52
        $region51: #{tpu_custom_call.1} parent=39 // pred_region
          %306 = dma.done %s299, 1024
        $region52: #{tpu_custom_call.1} parent=39 // pred_fallthru
          _
        %s307 = sand.u32 %s45, 1
        %s308 = scalar_lea.sflag [#allocation4], %s307
        %s309 = sand.u32 %s45, 1
        %s310 = smul.addr %s309, 32
        %s311 = scalar_lea.vmem [#allocation3], %s310
        %p312 = pneg %p58
        %p313 = pneg %p55
        %s314 = sand.u32 %s25, 1
        %s315 = scalar_lea.sflag [#allocation7], %s314
        %s316 = sand.u32 %s71, 1
        %s317 = smul.addr %s316, 64
        %s318 = scalar_lea.vmem [#allocation6], %s317
        %p319 = pneg %p84
        %p320 = pneg %p81
        %p321 = scmp.lt.s32.totalorder %s30, 1
        %s322 = scalar_select %p321, %s30, 1
        %s323 = scalar_lea.vmem %s2, %s322
        %p324 = pneg %p110
        %p325 = pneg %p107
        %s326 = sand.u32 %s25, 1
        %s327 = scalar_lea.sflag [#allocation7], %s326
        %s328 = sand.u32 %s123, 1
        %s329 = smul.addr %s328, 64
        %s330 = scalar_lea.vmem [#allocation8], %s329
        %p331 = pneg %p136
        %p332 = pneg %p133
        %p333 = pneg %p157
        %p334 = pneg %p154
        %p335 = pneg %p183
        %p336 = pneg %p180
        %s337 = sand.u32 %s170, 1
        %s338 = scalar_lea.sflag [#allocation5], %s337
        %s339 = sand.u32 %s170, 1
        %s340 = smul.addr %s339, 64
        %s341 = scalar_lea.vmem [#allocation9], %s340
        %s342 = smul.u32 8, %s29
        %p343 = scmp.lt.s32.totalorder %s30, 1
        %s344 = scalar_select %p343, %s30, 1
        %s345 = scalar_lea.vmem %s2, %s344
        %s346 = smul.u32 16, %s30
        %s347 = smul.u32 8, %s29
        %p349 = scmp.eq.s32.totalorder %s30, 0
        // Predicated region
        $region53: #{tpu_custom_call.1} parent=39 // pred_check
          %p350 = pneg %p349
        $region54: #{tpu_custom_call.1} parent=39 // pred_check_branch
          %352 = sbr.rel (%p350) target = $region56
        $region55: #{tpu_custom_call.1} parent=39 // pred_region
          %353 = vst [vmem:[#allocation2] sm:$0xff] 0.0
          %354 = vst [vmem:[#allocation2 + $0x8] sm:$0xff] 0.0
          %355 = vst [vmem:[#allocation2 + $0x10] sm:$0xff] 0.0
          %356 = vst [vmem:[#allocation2 + $0x18] sm:$0xff] 0.0
          %357 = vst [vmem:[#allocation2 + $0x20] sm:$0xff] 0.0
          %358 = vst [vmem:[#allocation2 + $0x28] sm:$0xff] 0.0
          %359 = vst [vmem:[#allocation2 + $0x30] sm:$0xff] 0.0
          %360 = vst [vmem:[#allocation2 + $0x38] sm:$0xff] 0.0
        $region56: #{tpu_custom_call.1} parent=39 // pred_fallthru
          _
        %v361 = vld [vmem:[%s284] sm:$0xf]
        %v362 = vld [vmem:[%s284 + $0x4] sm:$0xf]
        %v363 = vld [vmem:[%s284 + $0x8] sm:$0xf]
        %v364 = vld [vmem:[%s284 + $0xc] sm:$0xf]
        %v365 = vld [vmem:[%s284 + $0x10] sm:$0xf]
        %v366 = vld [vmem:[%s284 + $0x14] sm:$0xf]
        %v367 = vld [vmem:[%s284 + $0x18] sm:$0xf]
        %v368 = vld [vmem:[%s284 + $0x1c] sm:$0xf]
        %v369 = vld [vmem:[%s293] sm:$0xf]
        %v370 = vld [vmem:[%s293 + $0x4] sm:$0xf]
        %v371 = vld [vmem:[%s293 + $0x8] sm:$0xf]
        %v372 = vld [vmem:[%s293 + $0xc] sm:$0xf]
        %v373 = vld [vmem:[%s293 + $0x10] sm:$0xf]
        %v374 = vld [vmem:[%s293 + $0x14] sm:$0xf]
        %v375 = vld [vmem:[%s293 + $0x18] sm:$0xf]
        %v376 = vld [vmem:[%s293 + $0x1c] sm:$0xf]
        %v377 = vld [vmem:[%s293 + $0x20] sm:$0xf]
        %v378 = vld [vmem:[%s293 + $0x24] sm:$0xf]
        %v379 = vld [vmem:[%s293 + $0x28] sm:$0xf]
        %v380 = vld [vmem:[%s293 + $0x2c] sm:$0xf]
        %v381 = vld [vmem:[%s293 + $0x30] sm:$0xf]
        %v382 = vld [vmem:[%s293 + $0x34] sm:$0xf]
        %v383 = vld [vmem:[%s293 + $0x38] sm:$0xf]
        %v384 = vld [vmem:[%s293 + $0x3c] sm:$0xf]
        %v385 = vld [vmem:[%s345] sm:$0x1]
        %v387 = vlaneseq
        %v388 = vshrl.u32 %v387, 7
        %v389 = vsub.s32 0, %v388
        %v390 = vrot.slane %v385, %v389
        %v400 = vunpack.c.l.b16 %v361
        %v401 = vunpack.c.l.b16 %v362
        %v402 = vunpack.c.l.b16 %v363
        %v403 = vunpack.c.l.b16 %v364
        %v404 = vunpack.c.l.b16 %v365
        %v405 = vunpack.c.l.b16 %v366
        %v406 = vunpack.c.l.b16 %v367
        %v407 = vunpack.c.l.b16 %v368
        %v408 = vpack.c.b16 %v401, %v400
        %v409 = vpack.c.b16 %v403, %v402
        %v410 = vpack.c.b16 %v405, %v404
        %v411 = vpack.c.b16 %v407, %v406
        %v432 = vunpack.c.l.b16 %v369
        %v433 = vunpack.c.l.b16 %v370
        %v434 = vunpack.c.l.b16 %v371
        %v435 = vunpack.c.l.b16 %v372
        %v436 = vunpack.c.l.b16 %v373
        %v437 = vunpack.c.l.b16 %v374
        %v438 = vunpack.c.l.b16 %v375
        %v439 = vunpack.c.l.b16 %v376
        %v440 = vunpack.c.l.b16 %v377
        %v441 = vunpack.c.l.b16 %v378
        %v442 = vunpack.c.l.b16 %v379
        %v443 = vunpack.c.l.b16 %v380
        %v444 = vunpack.c.l.b16 %v381
        %v445 = vunpack.c.l.b16 %v382
        %v446 = vunpack.c.l.b16 %v383
        %v447 = vunpack.c.l.b16 %v384
        %v448 = vpack.c.b16 %v433, %v432
        %v449 = vpack.c.b16 %v435, %v434
        %v450 = vpack.c.b16 %v437, %v436
        %v451 = vpack.c.b16 %v439, %v438
        %v452 = vpack.c.b16 %v441, %v440
        %v453 = vpack.c.b16 %v443, %v442
        %v454 = vpack.c.b16 %v445, %v444
        %v455 = vpack.c.b16 %v447, %v446
        %464 = vmatprep.subr.bf16.mxu0 0
        %465 = vmatpush1.bf16.msra.mxu0 %v455
        %466 = vmatprep.subr.bf16.mxu0 0
        %467 = vmatpush1.bf16.msra.mxu0 %v454
        %468 = vmatprep.subr.bf16.mxu0 0
        %469 = vmatpush1.bf16.msra.mxu0 %v453
        %470 = vmatprep.subr.bf16.mxu0 0
        %471 = vmatpush1.bf16.msra.mxu0 %v452
        %472 = vmatprep.subr.bf16.mxu0 0
        %473 = vmatpush1.bf16.msra.mxu0 %v451
        %474 = vmatprep.subr.bf16.mxu0 0
        %475 = vmatpush1.bf16.msra.mxu0 %v450
        %476 = vmatprep.subr.bf16.mxu0 0
        %477 = vmatpush1.bf16.msra.mxu0 %v449
        %478 = vmatprep.subr.bf16.mxu0 0
        %479 = vmatpush1.bf16.msra.mxu0 %v448
        %480 = vmatprep.subr.bf16.mxu0 0
        %481 = vmatpush2.bf16.msra.mxu0 0
        %482 = vmatprep.subr.bf16.mxu0 0
        %483 = vmatpush2.bf16.msra.mxu0 0
        %484 = vmatprep.subr.bf16.mxu0 0
        %485 = vmatpush2.bf16.msra.mxu0 0
        %486 = vmatprep.subr.bf16.mxu0 0
        %487 = vmatpush2.bf16.msra.mxu0 0
        %488 = vmatprep.subr.bf16.mxu0 0
        %489 = vmatpush2.bf16.msra.mxu0 0
        %490 = vmatprep.subr.bf16.mxu0 0
        %491 = vmatpush2.bf16.msra.mxu0 0
        %492 = vmatprep.subr.bf16.mxu0 0
        %493 = vmatpush2.bf16.msra.mxu0 0
        %494 = vmatprep.subr.bf16.mxu0 0
        %495 = vmatpush2.bf16.msra.mxu0 0
        %496 = vmatprep.mubr.bf16.mxu0 0
        %497 = vmatmul.mubr.bf16.gmra.mxu0 %v408
        %v498 = vpop.f32.mrf.mxu0
        %v499 = vadd.f32 %v390, %v498
        %v500 = vpop.f32.mrf.mxu0
        %v501 = vpop.f32.mrf.mxu0
        %v502 = vadd.f32 %v390, %v501
        %v503 = vpop.f32.mrf.mxu0
        %504 = vmatprep.mubr.bf16.mxu0 0
        %505 = vmatmul.mubr.bf16.gmra.mxu0 %v409
        %v506 = vpop.f32.mrf.mxu0
        %v507 = vadd.f32 %v390, %v506
        %v508 = vpop.f32.mrf.mxu0
        %v509 = vpop.f32.mrf.mxu0
        %v510 = vadd.f32 %v390, %v509
        %v511 = vpop.f32.mrf.mxu0
        %512 = vmatprep.mubr.bf16.mxu0 0
        %513 = vmatmul.mubr.bf16.gmra.mxu0 %v410
        %v514 = vpop.f32.mrf.mxu0
        %v515 = vadd.f32 %v390, %v514
        %v516 = vpop.f32.mrf.mxu0
        %v517 = vpop.f32.mrf.mxu0
        %v518 = vadd.f32 %v390, %v517
        %v519 = vpop.f32.mrf.mxu0
        %520 = vmatprep.mubr.bf16.mxu0 0
        %521 = vmatmul.mubr.bf16.gmra.mxu0 %v411
        %v522 = vpop.f32.mrf.mxu0
        %v523 = vadd.f32 %v390, %v522
        %v524 = vpop.f32.mrf.mxu0
        %v525 = vpop.f32.mrf.mxu0
        %v526 = vadd.f32 %v390, %v525
        %v527 = vpop.f32.mrf.mxu0
        %528 = vdwg.mxu0
        %v529 = vmax.f32 %v499, 0.0
        %v530 = vmax.f32 %v502, 0.0
        %v531 = vmax.f32 %v507, 0.0
        %v532 = vmax.f32 %v510, 0.0
        %v533 = vmax.f32 %v515, 0.0
        %v534 = vmax.f32 %v518, 0.0
        %v535 = vmax.f32 %v523, 0.0
        %v536 = vmax.f32 %v526, 0.0
        %v537 = vld [vmem:[#allocation2] sm:$0xff]
        %v538 = vld [vmem:[#allocation2 + $0x8] sm:$0xff]
        %v539 = vld [vmem:[#allocation2 + $0x10] sm:$0xff]
        %v540 = vld [vmem:[#allocation2 + $0x18] sm:$0xff]
        %v541 = vld [vmem:[#allocation2 + $0x20] sm:$0xff]
        %v542 = vld [vmem:[#allocation2 + $0x28] sm:$0xff]
        %v543 = vld [vmem:[#allocation2 + $0x30] sm:$0xff]
        %v544 = vld [vmem:[#allocation2 + $0x38] sm:$0xff]
        %v545 = vpack.c.bf16 %v530, %v529
        %v546 = vpack.c.bf16 %v532, %v531
        %v547 = vpack.c.bf16 %v534, %v533
        %v548 = vpack.c.bf16 %v536, %v535
        %v549 = vld [vmem:[%s302] sm:$0xf]
        %v550 = vld [vmem:[%s302 + $0x4] sm:$0xf]
        %v551 = vld [vmem:[%s302 + $0x8] sm:$0xf]
        %v552 = vld [vmem:[%s302 + $0xc] sm:$0xf]
        %v553 = vld [vmem:[%s302 + $0x10] sm:$0xf]
        %v554 = vld [vmem:[%s302 + $0x14] sm:$0xf]
        %v555 = vld [vmem:[%s302 + $0x18] sm:$0xf]
        %v556 = vld [vmem:[%s302 + $0x1c] sm:$0xf]
        %v557 = vld [vmem:[%s302 + $0x20] sm:$0xf]
        %v558 = vld [vmem:[%s302 + $0x24] sm:$0xf]
        %v559 = vld [vmem:[%s302 + $0x28] sm:$0xf]
        %v560 = vld [vmem:[%s302 + $0x2c] sm:$0xf]
        %v561 = vld [vmem:[%s302 + $0x30] sm:$0xf]
        %v562 = vld [vmem:[%s302 + $0x34] sm:$0xf]
        %v563 = vld [vmem:[%s302 + $0x38] sm:$0xf]
        %v564 = vld [vmem:[%s302 + $0x3c] sm:$0xf]
        %v581 = vunpack.c.l.b16 %v549
        %v582 = vunpack.c.l.b16 %v550
        %v583 = vunpack.c.l.b16 %v551
        %v584 = vunpack.c.l.b16 %v552
        %v585 = vunpack.c.l.b16 %v553
        %v586 = vunpack.c.l.b16 %v554
        %v587 = vunpack.c.l.b16 %v555
        %v588 = vunpack.c.l.b16 %v556
        %v589 = vunpack.c.l.b16 %v557
        %v590 = vunpack.c.l.b16 %v558
        %v591 = vunpack.c.l.b16 %v559
        %v592 = vunpack.c.l.b16 %v560
        %v593 = vunpack.c.l.b16 %v561
        %v594 = vunpack.c.l.b16 %v562
        %v595 = vunpack.c.l.b16 %v563
        %v596 = vunpack.c.l.b16 %v564
        %v597 = vpack.c.b16 %v582, %v581
        %v598 = vpack.c.b16 %v584, %v583
        %v599 = vpack.c.b16 %v586, %v585
        %v600 = vpack.c.b16 %v588, %v587
        %v601 = vpack.c.b16 %v590, %v589
        %v602 = vpack.c.b16 %v592, %v591
        %v603 = vpack.c.b16 %v594, %v593
        %v604 = vpack.c.b16 %v596, %v595
        %613 = vmatprep.subr.bf16.mxu0 0
        %614 = vmatpush1.bf16.msra.mxu0 %v604
        %615 = vmatprep.subr.bf16.mxu0 0
        %616 = vmatpush1.bf16.msra.mxu0 %v603
        %617 = vmatprep.subr.bf16.mxu0 0
        %618 = vmatpush1.bf16.msra.mxu0 %v602
        %619 = vmatprep.subr.bf16.mxu0 0
        %620 = vmatpush1.bf16.msra.mxu0 %v601
        %621 = vmatprep.subr.bf16.mxu0 0
        %622 = vmatpush1.bf16.msra.mxu0 %v600
        %623 = vmatprep.subr.bf16.mxu0 0
        %624 = vmatpush1.bf16.msra.mxu0 %v599
        %625 = vmatprep.subr.bf16.mxu0 0
        %626 = vmatpush1.bf16.msra.mxu0 %v598
        %627 = vmatprep.subr.bf16.mxu0 0
        %628 = vmatpush1.bf16.msra.mxu0 %v597
        %629 = vmatprep.subr.bf16.mxu0 0
        %630 = vmatpush2.bf16.msra.mxu0 0
        %631 = vmatprep.subr.bf16.mxu0 0
        %632 = vmatpush2.bf16.msra.mxu0 0
        %633 = vmatprep.subr.bf16.mxu0 0
        %634 = vmatpush2.bf16.msra.mxu0 0
        %635 = vmatprep.subr.bf16.mxu0 0
        %636 = vmatpush2.bf16.msra.mxu0 0
        %637 = vmatprep.subr.bf16.mxu0 0
        %638 = vmatpush2.bf16.msra.mxu0 0
        %639 = vmatprep.subr.bf16.mxu0 0
        %640 = vmatpush2.bf16.msra.mxu0 0
        %641 = vmatprep.subr.bf16.mxu0 0
        %642 = vmatpush2.bf16.msra.mxu0 0
        %643 = vmatprep.subr.bf16.mxu0 0
        %644 = vmatpush2.bf16.msra.mxu0 0
        %645 = vmatprep.mubr.bf16.mxu0 0
        %646 = vmatmul.mubr.bf16.gmra.mxu0 %v545
        %v647 = vpop.f32.mrf.mxu0
        %v648 = vadd.f32 0.0, %v647
        %v649 = vpop.f32.mrf.mxu0
        %v650 = vpop.f32.mrf.mxu0
        %v651 = vadd.f32 0.0, %v650
        %v652 = vpop.f32.mrf.mxu0
        %653 = vmatprep.mubr.bf16.mxu0 0
        %654 = vmatmul.mubr.bf16.gmra.mxu0 %v546
        %v655 = vpop.f32.mrf.mxu0
        %v656 = vadd.f32 0.0, %v655
        %v657 = vpop.f32.mrf.mxu0
        %v658 = vpop.f32.mrf.mxu0
        %v659 = vadd.f32 0.0, %v658
        %v660 = vpop.f32.mrf.mxu0
        %661 = vmatprep.mubr.bf16.mxu0 0
        %662 = vmatmul.mubr.bf16.gmra.mxu0 %v547
        %v663 = vpop.f32.mrf.mxu0
        %v664 = vadd.f32 0.0, %v663
        %v665 = vpop.f32.mrf.mxu0
        %v666 = vpop.f32.mrf.mxu0
        %v667 = vadd.f32 0.0, %v666
        %v668 = vpop.f32.mrf.mxu0
        %669 = vmatprep.mubr.bf16.mxu0 0
        %670 = vmatmul.mubr.bf16.gmra.mxu0 %v548
        %v671 = vpop.f32.mrf.mxu0
        %v672 = vadd.f32 0.0, %v671
        %v673 = vpop.f32.mrf.mxu0
        %v674 = vpop.f32.mrf.mxu0
        %v675 = vadd.f32 0.0, %v674
        %v676 = vpop.f32.mrf.mxu0
        %677 = vdwg.mxu0
        %v678 = vadd.f32 %v537, %v648
        %v679 = vadd.f32 %v538, %v651
        %v680 = vadd.f32 %v539, %v656
        %v681 = vadd.f32 %v540, %v659
        %v682 = vadd.f32 %v541, %v664
        %v683 = vadd.f32 %v542, %v667
        %v684 = vadd.f32 %v543, %v672
        %v685 = vadd.f32 %v544, %v675
        %686 = vst [vmem:[#allocation2] sm:$0xff] %v678
        %687 = vst [vmem:[#allocation2 + $0x8] sm:$0xff] %v679
        %688 = vst [vmem:[#allocation2 + $0x10] sm:$0xff] %v680
        %689 = vst [vmem:[#allocation2 + $0x18] sm:$0xff] %v681
        %690 = vst [vmem:[#allocation2 + $0x20] sm:$0xff] %v682
        %691 = vst [vmem:[#allocation2 + $0x28] sm:$0xff] %v683
        %692 = vst [vmem:[#allocation2 + $0x30] sm:$0xff] %v684
        %693 = vst [vmem:[#allocation2 + $0x38] sm:$0xff] %v685
        %p694 = scmp.eq.s32.totalorder %s30, 1
        // Predicated region
        $region57: #{tpu_custom_call.1} parent=39 // pred_check
          %p695 = pneg %p694
        $region58: #{tpu_custom_call.1} parent=39 // pred_check_branch
          %697 = sbr.rel (%p695) target = $region60
        $region59: #{tpu_custom_call.1} parent=39 // pred_region
          %v698 = vld [vmem:[#allocation2] sm:$0xff]
          %v699 = vld [vmem:[#allocation2 + $0x8] sm:$0xff]
          %v700 = vld [vmem:[#allocation2 + $0x10] sm:$0xff]
          %v701 = vld [vmem:[#allocation2 + $0x18] sm:$0xff]
          %v702 = vld [vmem:[#allocation2 + $0x20] sm:$0xff]
          %v703 = vld [vmem:[#allocation2 + $0x28] sm:$0xff]
          %v704 = vld [vmem:[#allocation2 + $0x30] sm:$0xff]
          %v705 = vld [vmem:[#allocation2 + $0x38] sm:$0xff]
          %v706 = vld [vmem:[%s4] sm:$0x1]
          %v708 = vlaneseq
          %v709 = vshrl.u32 %v708, 7
          %v710 = vsub.s32 0, %v709
          %v711 = vrot.slane %v706, %v710
          %v713 = vadd.f32 %v698, %v711
          %v714 = vadd.f32 %v699, %v711
          %v715 = vadd.f32 %v700, %v711
          %v716 = vadd.f32 %v701, %v711
          %v717 = vadd.f32 %v702, %v711
          %v718 = vadd.f32 %v703, %v711
          %v719 = vadd.f32 %v704, %v711
          %v720 = vadd.f32 %v705, %v711
          %721 = vst [vmem:[%s341] sm:$0xff] %v713
          %722 = vst [vmem:[%s341 + $0x8] sm:$0xff] %v714
          %723 = vst [vmem:[%s341 + $0x10] sm:$0xff] %v715
          %724 = vst [vmem:[%s341 + $0x18] sm:$0xff] %v716
          %725 = vst [vmem:[%s341 + $0x20] sm:$0xff] %v717
          %726 = vst [vmem:[%s341 + $0x28] sm:$0xff] %v718
          %727 = vst [vmem:[%s341 + $0x30] sm:$0xff] %v719
          %728 = vst [vmem:[%s341 + $0x38] sm:$0xff] %v720
        $region60: #{tpu_custom_call.1} parent=39 // pred_fallthru
          _
        %s729 = sand.u32 %s170, 1
        %s730 = scalar_lea.sflag [#allocation5], %s729
        %s731 = sand.u32 %s170, 1
        %s732 = smul.addr %s731, 64
        %s733 = scalar_lea.vmem [#allocation9], %s732
        // Predicated region
        $region61: #{tpu_custom_call.1} parent=39 // pred_check
          %p734 = pneg %p180
        $region62: #{tpu_custom_call.1} parent=39 // pred_check_branch
          %736 = sbr.rel (%p734) target = $region64
        $region63: #{tpu_custom_call.1} parent=39 // pred_region
          %s737 = smul.u32 8, %s29
          %s739 = ssub.s32 1024, 1024
          %740 = vsyncadd %s730, %s739
          %s741 = smul.addr %s737, 128
          %s742 = scalar_lea.hbm %s5, %s741
          %s743 = sshll.u32 %s733, 4
          %s744 = int_to_ptr.vmem [resolvable:$true] %s743
          %749 = dma.vmem_to_hbm [thread:$0]  %s744, 1024, %s742, %s730, 128, 128, 8
        $region64: #{tpu_custom_call.1} parent=39 // pred_fallthru
          _
      $region40: #{tpu_custom_call.1} parent=5 // pred_fallthru
        _
      %p750 = scmp.le.s32.totalorder 2, %s20
      // Predicated region
      $region65: #{tpu_custom_call.1} parent=5 // pred_check
        %p751 = pneg %p750
      $region66: #{tpu_custom_call.1} parent=5 // pred_check_branch
        %753 = sbr.rel (%p751) target = $region68
      $region67: #{tpu_custom_call.1} parent=5 // pred_region
        %s754 = ssub.s32 %s20, 2
        // Predicated region
        $region69: #{tpu_custom_call.1} parent=67 // pred_check
          %p755 = pneg %p186
        $region70: #{tpu_custom_call.1} parent=67 // pred_check_branch
          %757 = sbr.rel (%p755) target = $region72
        $region71: #{tpu_custom_call.1} parent=67 // pred_region
          %s758 = sand.u32 %s171, 1
          %s759 = scalar_lea.sflag [#allocation5], %s758
          %s760 = sand.u32 %s171, 1
          %s761 = smul.addr %s760, 64
          %s762 = scalar_lea.vmem [#allocation9], %s761
          %763 = dma.done %s759, 1024
        $region72: #{tpu_custom_call.1} parent=67 // pred_fallthru
          _
      $region68: #{tpu_custom_call.1} parent=5 // pred_fallthru
        _
    $region6: #{tpu_custom_call.1} parent=1 // loop_footer
      %s24 = sadd.s32 1, %s20
    $region7: #{tpu_custom_call.1} parent=1 // loop_footer_branch
      %19 = sbr.rel target = $region3
    $region8: #{tpu_custom_call.1} parent=1 // loop_exit
      _
    %764 = vsyncpa [#allocation4], 1
    %s765 = scalar_lea.sflag [#allocation4], 1
    %766 = vsyncpa %s765, 1
    %767 = vsyncpa [#allocation7], 1
    %s768 = scalar_lea.sflag [#allocation7], 1
    %769 = vsyncpa %s768, 1
    %770 = vsyncpa [#allocation5], 1
    %s771 = scalar_lea.sflag [#allocation5], 1
    %772 = vsyncpa %s771, 1

</llo_original>
